<compile_context>
chip_gen: v7x
topology: tpu7x:2x2x1
jax: 0.10.0
libtpu: 0.0.40
codegen_flags: <defaults>
</compile_context>

<pallas_src>
import functools
import math

import jax
import jax.numpy as jnp
from jax.experimental import pallas as pl
from jax.experimental.pallas import tpu as pltpu


def _loss_kernel(gt_ref, p1_ref, p2_ref, m_ref, out_ref, acc_sum, acc_cnt,
                 *, gamma, mu, log_mu):
    b = pl.program_id(1)          # batch-chunk index (reduction axis)
    l = pl.program_id(2)          # lane-chunk index (reduction axis)
    nb = pl.num_programs(1)
    nl = pl.num_programs(2)

    @pl.when(jnp.logical_and(b == 0, l == 0))
    def _init():
        acc_sum[...] = jnp.zeros_like(acc_sum)
        acc_cnt[...] = jnp.zeros_like(acc_cnt)

    gt = gt_ref[...].astype(jnp.float32)
    p1 = p1_ref[...].astype(jnp.float32)   # log-precision channel (pred[:,0])
    p2 = p2_ref[...].astype(jnp.float32)   # scaled-mean channel   (pred[:,1])
    m = m_ref[...]
    sel = m if m.dtype == jnp.bool_ else (m != 0)   # any mask dtype accepted

    # denom = max(exp(min(p1, gamma)), mu) == 1 / errVar   (matches reference)
    capped = jnp.minimum(p1, jnp.float32(gamma))
    denom = jnp.maximum(jnp.exp(capped), jnp.float32(mu))
    # log(denom) == max(min(p1, gamma), log(mu))  -- no in-kernel jnp.log
    log_denom = jnp.maximum(capped, jnp.float32(log_mu))
    err_var = 1.0 / denom                       # the only divide in the kernel
    mean_pred = err_var * p2
    mean_diff = (gt - mean_pred) ** 2
    # log(errVar) + mean_diff / errVar  ==  mean_diff * denom - log(denom)
    per_elem = mean_diff * denom - log_denom

    # Elementwise (VPU) accumulate of the masked sum; lane-reduced (XLU, idle
    # slot) accumulate of the masked count into a (TB, 1) scratch.
    acc_sum[...] += jnp.where(sel, per_elem, 0.0)
    acc_cnt[...] += jnp.sum(jnp.where(sel, 1.0, 0.0), axis=-1, keepdims=True)

    @pl.when(jnp.logical_and(b == nb - 1, l == nl - 1))
    def _finalize():
        # Single cross-lane reduction per partial, written to SMEM output.
        out_ref[0, 0] = jnp.sum(acc_sum[...])
        out_ref[0, 1] = jnp.sum(acc_cnt[...])


def _vmem_capacity_bytes():
    try:
        info = pltpu.get_tpu_info()
        for attr in ("vmem_capacity_bytes", "vmem_bytes", "vmem_size_bytes"):
            cap = getattr(info, attr, None)
            if cap:
                return int(cap)
    except Exception:
        pass
    return 128 << 20


def _choose_tiling(B, L, mask_itemsize):
    """Pick (P, NBP, NLP, TB, TL, NL, split_batch, vmem_limit)."""
    cap = _vmem_capacity_bytes()
    # v7x-class parts have 64 MiB VMEM per TensorCore -> smaller tiles.
    target_tile_bytes = (2 << 20) if cap <= (64 << 20) else (4 << 20)

    # Sublane (batch) tile: 8/32-aligned, or the full dim (always layout-legal).
    # TODO(synk): for 1 < B < 8 with large L, fold spatial rows into the
    # sublane dim to avoid the B->8 sublane padding of gt/mask/accumulators.
    if B % 32 == 0:
        TB = 32
    elif B % 8 == 0:
        TB = 8
    else:
        TB = B

    # Lane tile: multiple of 128 dividing L near the byte target; else full row.
    # TODO(synk): masked lane tail (cdiv grid + iota mask) for awkward H*W
    # whose 128-divisor structure forces a tiny TL or a full-row tile.
    if L % 128 == 0:
        nl_units = L // 128
        max_units = max(1, (target_tile_bytes // (4 * TB)) // 128)
        cl = 1
        for d in range(min(nl_units, max_units), 0, -1):
            if nl_units % d == 0:
                cl = d
                break
        TL = 128 * cl
    else:
        TL = L

    NB = B // TB
    NL = L // TL

    # Two independent partials so both v7x TensorCores stay busy: split the
    # batch-block axis when it is even, otherwise the lane-block axis.
    if NB % 2 == 0:
        P, NBP, NLP, split_batch = 2, NB // 2, NL, True
    elif NL % 2 == 0:
        P, NBP, NLP, split_batch = 2, NB, NL // 2, False
    else:
        P, NBP, NLP, split_batch = 1, NB, NL, True   # tiny grid, nothing to split

    # Working set: double-buffered inputs (gt + 2 pred channels + mask) +
    # persistent accumulators, plus headroom for Mosaic internals.
    tile_f32 = TB * TL * 4
    working = 2 * (3 * tile_f32 + TB * TL * mask_itemsize) + tile_f32 + TB * 512
    vmem_limit = int(max(32 << 20, working + (8 << 20)))

    return P, NBP, NLP, TB, TL, NL, split_batch, vmem_limit


def log_likelihood_loss(gt, pred, mask, gamma=10.0, mu=0.001):
    """Pallas implementation of LogLikelihoodLoss.forward."""
    assert pred.ndim == 4 and pred.shape[1] == 2
    B, _, H, W = pred.shape
    assert gt.shape == (B, H, W) and mask.shape == (B, H, W)
    L = H * W

    # Free (contiguous) reshapes -- no HBM copies, no channel slicing, no mask
    # dtype conversion in the wrapper.
    gt2 = gt.reshape(B, L)
    pred2 = pred.reshape(B, 2 * L)     # [:, :L] = channel 0, [:, L:] = channel 1
    mask2 = mask.reshape(B, L)         # native dtype, handled in-kernel

    mask_itemsize = jnp.dtype(mask2.dtype).itemsize
    (P, NBP, NLP, TB, TL, NL, split_batch, vmem_limit) = _choose_tiling(
        B, L, mask_itemsize)

    if split_batch:
        b_of = lambda p, b: p * NBP + b
        l_of = lambda p, l: l
    else:
        b_of = lambda p, b: b
        l_of = lambda p, l: p * NLP + l

    kernel = functools.partial(_loss_kernel, gamma=float(gamma), mu=float(mu),
                               log_mu=math.log(float(mu)))
    N = B * L

    partials = pl.pallas_call(
        kernel,
        out_shape=jax.ShapeDtypeStruct((P, 2), jnp.float32),
        grid_spec=pltpu.PrefetchScalarGridSpec(
            num_scalar_prefetch=0,
            grid=(P, NBP, NLP),
            in_specs=[
                pl.BlockSpec((TB, TL), lambda p, b, l: (b_of(p, b), l_of(p, l))),
                pl.BlockSpec((TB, TL),                                   # pred channel 0
                             lambda p, b, l: (b_of(p, b), l_of(p, l))),
                pl.BlockSpec((TB, TL),                                   # pred channel 1
                             lambda p, b, l: (b_of(p, b), NL + l_of(p, l))),
                pl.BlockSpec((TB, TL), lambda p, b, l: (b_of(p, b), l_of(p, l))),
            ],
            out_specs=pl.BlockSpec(
                (1, 2), lambda p, b, l: (p, 0),
                memory_space=pltpu.MemorySpace.SMEM,
            ),
            scratch_shapes=[
                pltpu.VMEM((TB, TL), jnp.float32),   # masked per-element sum
                pltpu.VMEM((TB, 1), jnp.float32),    # masked count (lane-reduced)
            ],
        ),
        compiler_params=pltpu.CompilerParams(
            dimension_semantics=("parallel", "arbitrary", "arbitrary"),
            vmem_limit_bytes=vmem_limit,
        ),
        cost_estimate=pl.CostEstimate(
            flops=12 * N, transcendentals=N,
            bytes_accessed=(12 + mask_itemsize) * N + 8 * P,
        ),
    )(gt2, pred2, pred2, mask2)

    # Combine the tiny per-TensorCore partials in plain JAX.
    return jnp.sum(partials[:, 0]) / jnp.sum(partials[:, 1])


def _reference_loss(gt, pred, mask, gamma=10.0, mu=0.001):
    """Pure-JAX reference mirroring the PyTorch module semantics."""
    pred1 = pred[:, 0, :, :]
    pred2 = pred[:, 1, :, :]
    err_var = 1.0 / jnp.maximum(jnp.exp(jnp.minimum(pred1, gamma)), mu)
    mean_pred = err_var * pred2
    mean_diff = (gt - mean_pred) ** 2
    per_elem = jnp.log(err_var) + mean_diff / err_var
    masked_sum = jnp.sum(jnp.where(mask, per_elem, 0.0))
    cnt = jnp.sum(mask.astype(jnp.float32))
    return masked_sum / cnt


if __name__ == "__main__":
    key = jax.random.PRNGKey(0)

    # NOTE: an all-False mask yields Inf/NaN (divide by zero count), matching
    # the PyTorch module; tests guarantee at least one selected element.
    cases = [
        ((2, 16, 16), jnp.bool_),      # bool mask, small odd batch
        ((3, 8, 16), jnp.bool_),       # bool mask, odd batch + single lane block
        ((16, 64, 64), jnp.float32),   # float mask, exercises the 2-partial path
    ]
    for (B, H, W), mdtype in cases:
        key, k_gt, k_pred, k_mask = jax.random.split(key, 4)
        gt = jax.random.normal(k_gt, (B, H, W), dtype=jnp.float32)
        pred = jax.random.normal(k_pred, (B, 2, H, W), dtype=jnp.float32)
        mask = jax.random.bernoulli(k_mask, p=0.5, shape=(B, H, W))
        mask = mask.at[0, 0, 0].set(True)
        mask_in = mask if mdtype == jnp.bool_ else mask.astype(mdtype)

        loss = jax.block_until_ready(
            log_likelihood_loss(gt, pred, mask_in, gamma=10.0, mu=0.001)
        )
        ref = _reference_loss(gt, pred, mask, gamma=10.0, mu=0.001)
        assert jnp.allclose(loss, ref, rtol=1e-5, atol=1e-5), ((B, H, W), loss, ref)

    print("KERNEL_OK")
</pallas_src>

<mosaic_0001>
module attributes {stable_mosaic.version = 11 : i64} {
  func.func @_loss_kernel(%arg0: i32, %arg1: i32, %arg2: i32, %arg3: memref<2x256xf32, #tpu.memory_space<vmem>>, %arg4: memref<2x256xf32, #tpu.memory_space<vmem>>, %arg5: memref<2x256xf32, #tpu.memory_space<vmem>>, %arg6: memref<2x256xi32, #tpu.memory_space<vmem>>, %arg7: memref<1x2xf32, #tpu.memory_space<smem>>, %arg8: memref<2x256xf32, #tpu.memory_space<vmem>>, %arg9: memref<2x1xf32, #tpu.memory_space<vmem>>) attributes {dimension_semantics = [#tpu.dimension_semantics<parallel>, #tpu.dimension_semantics<arbitrary>, #tpu.dimension_semantics<arbitrary>], iteration_bounds = array<i64: 1, 1, 1>, scalar_prefetch = 0 : i64, scratch_operands = 2 : i64, tpu.core_type = #tpu.core_type<tc>, window_params = [{transform_indices = @transform_0, window_bounds = array<i64: 2, 256>}, {transform_indices = @transform_1, window_bounds = array<i64: 2, 256>}, {transform_indices = @transform_2, window_bounds = array<i64: 2, 256>}, {transform_indices = @transform_3, window_bounds = array<i64: 2, 256>}, {transform_indices = @transform_4, window_bounds = array<i64: 1, 2>}]} {
    %c0_i32 = arith.constant 0 : i32
    %0 = arith.cmpi eq, %arg1, %c0_i32 : i32
    %c0_i32_0 = arith.constant 0 : i32
    %1 = arith.cmpi eq, %arg2, %c0_i32_0 : i32
    %2 = arith.andi %0, %1 : i1
    %3 = arith.extui %2 : i1 to i32
    %c0_i32_1 = arith.constant 0 : i32
    %4 = arith.cmpi ne, %3, %c0_i32_1 : i32
    scf.if %4 {
      %cst_28 = arith.constant 0.000000e+00 : f32
      %42 = vector.broadcast %cst_28 : f32 to vector<2x256xf32>
      %c0_29 = arith.constant 0 : index
      %c0_30 = arith.constant 0 : index
      %43 = vector.load %arg8[%c0_29, %c0_30] : memref<2x256xf32, #tpu.memory_space<vmem>>, vector<2x256xf32>
      tpu.vector_store %arg8[%c0_29, %c0_30], %42 {strides = array<i32>} : memref<2x256xf32, #tpu.memory_space<vmem>>, vector<2x256xf32>,
      %cst_31 = arith.constant 0.000000e+00 : f32
      %44 = vector.broadcast %cst_31 : f32 to vector<2x1xf32>
      %c0_32 = arith.constant 0 : index
      %c0_33 = arith.constant 0 : index
      %45 = vector.load %arg9[%c0_32, %c0_33] : memref<2x1xf32, #tpu.memory_space<vmem>>, vector<2x1xf32>
      tpu.vector_store %arg9[%c0_32, %c0_33], %44 {strides = array<i32>} : memref<2x1xf32, #tpu.memory_space<vmem>>, vector<2x1xf32>,
    } else {
    }
    %c0 = arith.constant 0 : index
    %c0_2 = arith.constant 0 : index
    %5 = vector.load %arg3[%c0, %c0_2] : memref<2x256xf32, #tpu.memory_space<vmem>>, vector<2x256xf32>
    %c0_3 = arith.constant 0 : index
    %c0_4 = arith.constant 0 : index
    %6 = vector.load %arg4[%c0_3, %c0_4] : memref<2x256xf32, #tpu.memory_space<vmem>>, vector<2x256xf32>
    %c0_5 = arith.constant 0 : index
    %c0_6 = arith.constant 0 : index
    %7 = vector.load %arg5[%c0_5, %c0_6] : memref<2x256xf32, #tpu.memory_space<vmem>>, vector<2x256xf32>
    %c0_7 = arith.constant 0 : index
    %c0_8 = arith.constant 0 : index
    %8 = vector.load %arg6[%c0_7, %c0_8] : memref<2x256xi32, #tpu.memory_space<vmem>>, vector<2x256xi32>
    %cst = arith.constant dense<0> : vector<2x256xi32>
    %9 = arith.cmpi ne, %8, %cst : vector<2x256xi32>
    %cst_9 = arith.constant 1.000000e+01 : f32
    %10 = vector.broadcast %cst_9 : f32 to vector<2x256xf32>
    %11 = arith.minimumf %6, %10 : vector<2x256xf32>
    %12 = math.exp %11 : vector<2x256xf32>
    %cst_10 = arith.constant 1.000000e-03 : f32
    %13 = vector.broadcast %cst_10 : f32 to vector<2x256xf32>
    %14 = arith.maximumf %12, %13 : vector<2x256xf32>
    %cst_11 = arith.constant -6.90775537 : f32
    %15 = vector.broadcast %cst_11 : f32 to vector<2x256xf32>
    %16 = arith.maximumf %11, %15 : vector<2x256xf32>
    %cst_12 = arith.constant 1.000000e+00 : f32
    %17 = vector.broadcast %cst_12 : f32 to vector<2x256xf32>
    %18 = arith.divf %17, %14 : vector<2x256xf32>
    %19 = arith.mulf %18, %7 : vector<2x256xf32>
    %20 = arith.subf %5, %19 : vector<2x256xf32>
    %21 = arith.mulf %20, %20 : vector<2x256xf32>
    %22 = arith.mulf %21, %14 : vector<2x256xf32>
    %23 = arith.subf %22, %16 : vector<2x256xf32>
    %c0_13 = arith.constant 0 : index
    %c0_14 = arith.constant 0 : index
    %24 = vector.load %arg8[%c0_13, %c0_14] : memref<2x256xf32, #tpu.memory_space<vmem>>, vector<2x256xf32>
    %cst_15 = arith.constant 0.000000e+00 : f32
    %25 = vector.broadcast %cst_15 : f32 to vector<2x256xf32>
    %26 = arith.select %9, %23, %25 : vector<2x256xi1>, vector<2x256xf32>
    %27 = arith.addf %24, %26 : vector<2x256xf32>
    %c0_16 = arith.constant 0 : index
    %c0_17 = arith.constant 0 : index
    %28 = vector.load %arg8[%c0_16, %c0_17] : memref<2x256xf32, #tpu.memory_space<vmem>>, vector<2x256xf32>
    tpu.vector_store %arg8[%c0_16, %c0_17], %27 {strides = array<i32>} : memref<2x256xf32, #tpu.memory_space<vmem>>, vector<2x256xf32>,
    %c0_18 = arith.constant 0 : index
    %c0_19 = arith.constant 0 : index
    %29 = vector.load %arg9[%c0_18, %c0_19] : memref<2x1xf32, #tpu.memory_space<vmem>>, vector<2x1xf32>
    %cst_20 = arith.constant 1.000000e+00 : f32
    %cst_21 = arith.constant 0.000000e+00 : f32
    %30 = vector.broadcast %cst_20 : f32 to vector<2x256xf32>
    %31 = vector.broadcast %cst_21 : f32 to vector<2x256xf32>
    %32 = arith.select %9, %30, %31 : vector<2x256xi1>, vector<2x256xf32>
    %cst_22 = arith.constant dense<0.000000e+00> : vector<2xf32>
    %33 = vector.multi_reduction <add>, %32, %cst_22 [1] : vector<2x256xf32> to vector<2xf32>
    %34 = vector.shape_cast %33 : vector<2xf32> to vector<2x1xf32>
    %35 = arith.addf %29, %34 : vector<2x1xf32>
    %c0_23 = arith.constant 0 : index
    %c0_24 = arith.constant 0 : index
    %36 = vector.load %arg9[%c0_23, %c0_24] : memref<2x1xf32, #tpu.memory_space<vmem>>, vector<2x1xf32>
    tpu.vector_store %arg9[%c0_23, %c0_24], %35 {strides = array<i32>} : memref<2x1xf32, #tpu.memory_space<vmem>>, vector<2x1xf32>,
    %c0_i32_25 = arith.constant 0 : i32
    %37 = arith.cmpi eq, %arg1, %c0_i32_25 : i32
    %c0_i32_26 = arith.constant 0 : i32
    %38 = arith.cmpi eq, %arg2, %c0_i32_26 : i32
    %39 = arith.andi %37, %38 : i1
    %40 = arith.extui %39 : i1 to i32
    %c0_i32_27 = arith.constant 0 : i32
    %41 = arith.cmpi ne, %40, %c0_i32_27 : i32
    scf.if %41 {
      %c0_28 = arith.constant 0 : index
      %c0_29 = arith.constant 0 : index
      %42 = vector.load %arg8[%c0_28, %c0_29] : memref<2x256xf32, #tpu.memory_space<vmem>>, vector<2x256xf32>
      %43 = vector.shape_cast %42 : vector<2x256xf32> to vector<1x2x256xf32>
      %cst_30 = arith.constant dense<0.000000e+00> : vector<1xf32>
      %44 = vector.multi_reduction <add>, %43, %cst_30 [1, 2] : vector<1x2x256xf32> to vector<1xf32>
      %45 = vector.shape_cast %44 : vector<1xf32> to vector<1x1x1xf32>
      %46 = vector.extract %45[0, 0, 0] : f32 from vector<1x1x1xf32>
      %c0_31 = arith.constant 0 : index
      %c0_32 = arith.constant 0 : index
      %47 = memref.load %arg7[%c0_31, %c0_32] : memref<1x2xf32, #tpu.memory_space<smem>>
      memref.store %46, %arg7[%c0_31, %c0_32] : memref<1x2xf32, #tpu.memory_space<smem>>
      %c0_33 = arith.constant 0 : index
      %c0_34 = arith.constant 0 : index
      %48 = vector.load %arg9[%c0_33, %c0_34] : memref<2x1xf32, #tpu.memory_space<vmem>>, vector<2x1xf32>
      %49 = vector.shape_cast %48 : vector<2x1xf32> to vector<1x2x1xf32>
      %cst_35 = arith.constant dense<0.000000e+00> : vector<1xf32>
      %50 = vector.multi_reduction <add>, %49, %cst_35 [1, 2] : vector<1x2x1xf32> to vector<1xf32>
      %51 = vector.shape_cast %50 : vector<1xf32> to vector<1x1x1xf32>
      %52 = vector.extract %51[0, 0, 0] : f32 from vector<1x1x1xf32>
      %c0_36 = arith.constant 0 : index
      %c1 = arith.constant 1 : index
      %53 = memref.load %arg7[%c0_36, %c1] : memref<1x2xf32, #tpu.memory_space<smem>>
      memref.store %52, %arg7[%c0_36, %c1] : memref<1x2xf32, #tpu.memory_space<smem>>
    } else {
    }
    return
  }
  func.func @transform_0(%arg0: i32, %arg1: i32, %arg2: i32) -> (i32, i32) {
    %c1_i32 = arith.constant 1 : i32
    %0 = arith.muli %arg0, %c1_i32 : i32
    %1 = arith.addi %0, %arg1 : i32
    %c0_i32 = arith.constant 0 : i32
    return %1, %arg2 : i32, i32
  }
  func.func @transform_1(%arg0: i32, %arg1: i32, %arg2: i32) -> (i32, i32) {
    %c1_i32 = arith.constant 1 : i32
    %0 = arith.muli %arg0, %c1_i32 : i32
    %1 = arith.addi %0, %arg1 : i32
    %c0_i32 = arith.constant 0 : i32
    return %1, %arg2 : i32, i32
  }
  func.func @transform_2(%arg0: i32, %arg1: i32, %arg2: i32) -> (i32, i32) {
    %c1_i32 = arith.constant 1 : i32
    %0 = arith.muli %arg0, %c1_i32 : i32
    %1 = arith.addi %0, %arg1 : i32
    %c1_i32_0 = arith.constant 1 : i32
    %2 = arith.addi %c1_i32_0, %arg2 : i32
    %c0_i32 = arith.constant 0 : i32
    return %1, %2 : i32, i32
  }
  func.func @transform_3(%arg0: i32, %arg1: i32, %arg2: i32) -> (i32, i32) {
    %c1_i32 = arith.constant 1 : i32
    %0 = arith.muli %arg0, %c1_i32 : i32
    %1 = arith.addi %0, %arg1 : i32
    %c0_i32 = arith.constant 0 : i32
    return %1, %arg2 : i32, i32
  }
  func.func @transform_4(%arg0: i32, %arg1: i32, %arg2: i32) -> (i32, i32) {
    %c0_i32 = arith.constant 0 : i32
    %c0_i32_0 = arith.constant 0 : i32
    return %arg0, %c0_i32 : i32, i32
  }
}

</mosaic_0001>

<llo_original>
// kernel: tpu_custom_call.1
$region0: #{tpu_custom_call.1}
  #allocation0 [shape = 'u32[]', space=smem, size = 0x4, offset = 0x4, fixed_abs, tag = 'smem constant byte address 0x4 - core index']
  #allocation1 [shape = 'u32[144,128]{1,0:T(1,128)}', space=vmem, size = 0x12000, scoped, tag = 'internal scratch']
  #allocation2 [shape = 'f32[2,256]{1,0:T(2,128)}', space=vmem, size = 0x800, scoped, tag = 'scratch operand']
  #allocation3 [shape = 'f32[2,1]{1,0:T(2,128)}', space=vmem, size = 0x400, scoped, tag = 'scratch operand']
  %s0 = inlined_call_operand.hbm [shape: f32[2,256], index: 0, kind: input, shape index: {}]
  %s1 = inlined_call_operand.vmem [shape: f32[2,512], index: 1, kind: input, shape index: {}]
  %s2 = inlined_call_operand.hbm [shape: f32[2,512], index: 2, kind: input, shape index: {}]
  %s3 = inlined_call_operand.vmem [shape: s32[2,256], index: 3, kind: input, shape index: {}]
  %s4 = inlined_call_operand.hbm [shape: f32[1,2], index: 4, kind: output, shape index: {}]
  %s5 = sld [smem:[#allocation0]]
  $region42: #{tpu_custom_call.1} parent=0
    _
  %s7 = ssub.s32 1, %s5
  %s8 = scalar_select 0, %s7, %s5
  $region1: #{tpu_custom_call.1} parent=0
    #allocation4 [shape = 'u8[2048]{0}', space=vmem, size = 0x800, scoped, tag = 'input window, operand 0, single buffered']
    #allocation5 [shape = 's32[1]{0}', space=sflag, size = 0x4, scoped, tag = 'scoped memory for tpu_custom_call.1']
    #allocation6 [shape = 's32[1]{0}', space=sflag, size = 0x4, scoped, tag = 'scoped memory for tpu_custom_call.1']
    #allocation7 [shape = 'u8[2048]{0}', space=vmem, size = 0x800, scoped, tag = 'input window, operand 2, single buffered']
    #allocation8 [shape = 's32[1]{0}', space=sflag, size = 0x4, scoped, tag = 'scoped memory for tpu_custom_call.1']
    #allocation9 [shape = 'u8[512]{0}', space=smem, size = 0x200, scoped, tag = 'output window, operand 0, single buffered']
    %9 = vsyncpa [#allocation5], 0
    %10 = vsyncpa [#allocation8], 0
    %11 = vsyncpa [#allocation6], 0
    // Predicated region
    $region2: #{tpu_custom_call.1} parent=1 // pred_check
      _
    $region3: #{tpu_custom_call.1} parent=1 // pred_check_branch
      %13 = sbr.rel (0) target = $region5
    $region4: #{tpu_custom_call.1} parent=1 // pred_region
      %s14 = sadd.s32 0, 0
      %s16 = ssub.s32 64, 64
      %17 = vsyncadd [#allocation5], %s16
      %s18 = smul.addr %s14, 2
      %s19 = smul.addr %s18, 32
      %s20 = scalar_lea.hbm %s0, %s19
      %s22 = sshll.u32 [#allocation4], 4
      %s23 = int_to_ptr.vmem [resolvable:$true] %s22
      %25 = dma.hbm_to_vmem [thread:$0]  %s20, 64, %s23, [#allocation5]
    $region5: #{tpu_custom_call.1} parent=1 // pred_fallthru
      _
    // Predicated region
    $region6: #{tpu_custom_call.1} parent=1 // pred_check
      _
    $region7: #{tpu_custom_call.1} parent=1 // pred_check_branch
      %27 = sbr.rel (0) target = $region9
    $region8: #{tpu_custom_call.1} parent=1 // pred_region
      %s28 = sadd.s32 0, 0
      %p29 = scmp.lt.s32.totalorder %s28, 0
      %s30 = scalar_select %p29, %s28, 0
      %s31 = smul.addr %s30, 4
      %s32 = smul.addr %s31, 2
      %s33 = scalar_lea.vmem %s1, %s32
      %s34 = sadd.s32 0, 0
    $region9: #{tpu_custom_call.1} parent=1 // pred_fallthru
      _
    // Predicated region
    $region10: #{tpu_custom_call.1} parent=1 // pred_check
      _
    $region11: #{tpu_custom_call.1} parent=1 // pred_check_branch
      %36 = sbr.rel (0) target = $region13
    $region12: #{tpu_custom_call.1} parent=1 // pred_region
      %s37 = sadd.s32 0, 0
      %s38 = sadd.s32 0, 1
      %s39 = smul.u32 2, %s38
      %s41 = ssub.s32 64, 64
      %42 = vsyncadd [#allocation8], %s41
      %s43 = smul.addr %s37, 4
      %s44 = sadd.s32 %s39, %s43
      %s45 = smul.addr %s44, 32
      %s46 = scalar_lea.hbm %s2, %s45
      %s48 = sshll.u32 [#allocation7], 4
      %s49 = int_to_ptr.vmem [resolvable:$true] %s48
      %51 = dma.hbm_to_vmem [thread:$0]  %s46, 64, %s49, [#allocation8]
    $region13: #{tpu_custom_call.1} parent=1 // pred_fallthru
      _
    // Predicated region
    $region14: #{tpu_custom_call.1} parent=1 // pred_check
      _
    $region15: #{tpu_custom_call.1} parent=1 // pred_check_branch
      %53 = sbr.rel (0) target = $region17
    $region16: #{tpu_custom_call.1} parent=1 // pred_region
      %s54 = sadd.s32 0, 0
      %p55 = scmp.lt.s32.totalorder %s54, 0
      %s56 = scalar_select %p55, %s54, 0
      %s57 = smul.addr %s56, 2
      %s58 = smul.addr %s57, 2
      %s59 = scalar_lea.vmem %s3, %s58
      %s60 = sadd.s32 0, 0
    $region17: #{tpu_custom_call.1} parent=1 // pred_fallthru
      _
    // Predicated region
    $region18: #{tpu_custom_call.1} parent=1 // pred_check
      _
    $region19: #{tpu_custom_call.1} parent=1 // pred_check_branch
      %62 = sbr.rel (0) target = $region21
    $region20: #{tpu_custom_call.1} parent=1 // pred_region
      %63 = dma.done [#allocation5], 64
    $region21: #{tpu_custom_call.1} parent=1 // pred_fallthru
      _
    // Predicated region
    $region22: #{tpu_custom_call.1} parent=1 // pred_check
      _
    $region23: #{tpu_custom_call.1} parent=1 // pred_check_branch
      %65 = sbr.rel (0) target = $region25
    $region24: #{tpu_custom_call.1} parent=1 // pred_region
      %66 = dma.done [#allocation8], 64
    $region25: #{tpu_custom_call.1} parent=1 // pred_fallthru
      _
    %s67 = sadd.s32 0, 0
    %p68 = scmp.lt.s32.totalorder %s67, 0
    %s69 = scalar_select %p68, %s67, 0
    %s70 = smul.addr %s69, 4
    %s71 = smul.addr %s70, 2
    %s72 = scalar_lea.vmem %s1, %s71
    %s73 = sadd.s32 0, 0
    %p74 = scmp.lt.s32.totalorder %s73, 0
    %s75 = scalar_select %p74, %s73, 0
    %s76 = smul.addr %s75, 2
    %s77 = smul.addr %s76, 2
    %s78 = scalar_lea.vmem %s3, %s77
    %s79 = sadd.s32 0, 0
    %s80 = sadd.s32 0, 0
    %p81 = scmp.lt.s32.totalorder %s80, 0
    %s82 = scalar_select %p81, %s80, 0
    %s83 = smul.addr %s82, 4
    %s84 = smul.addr %s83, 2
    %s85 = scalar_lea.vmem %s1, %s84
    %s86 = sadd.s32 0, 0
    %s87 = sadd.s32 0, 0
    %s88 = sadd.s32 0, 1
    %s89 = smul.u32 2, %s88
    %s90 = sadd.s32 0, 0
    %p91 = scmp.lt.s32.totalorder %s90, 0
    %s92 = scalar_select %p91, %s90, 0
    %s93 = smul.addr %s92, 2
    %s94 = smul.addr %s93, 2
    %s95 = scalar_lea.vmem %s3, %s94
    %s96 = sadd.s32 0, 0
    %p97 = scmp.eq.s32.totalorder 0, 0
    %p98 = scmp.eq.s32.totalorder 0, 0
    %p99 = pnand %p97, %p98
    %p100 = pneg %p99
    // Predicated region
    $region26: #{tpu_custom_call.1} parent=1 // pred_check
      _
    $region27: #{tpu_custom_call.1} parent=1 // pred_check_branch
      %102 = sbr.rel (%p99) target = $region29
    $region28: #{tpu_custom_call.1} parent=1 // pred_region
      %103 = vst [vmem:[#allocation2] sm:$0xf] 0.0
      %vm104 = vcmask 1024
      %105 = vst.msk [vmem:[#allocation3] sm:$0x3] %vm104, 0.0
    $region29: #{tpu_custom_call.1} parent=1 // pred_fallthru
      _
    %v106 = vld [vmem:[#allocation4] sm:$0xf]
    %v107 = vld [vmem:[%s85] sm:$0xf]
    %v108 = vld [vmem:[#allocation7] sm:$0xf]
    %v109 = vld [vmem:[%s95] sm:$0xf]
    %vm110 = vcmp.ne.s32.totalorder %v109, 0
    %v111 = vmin.f32 %v107, 10.0
    %v112 = vmul.f32 %v111, 1.442695
    %v113 = vpow.pop %v112
    %v114 = vmax.f32 %v113, 0.001
    %v115 = vmax.f32 %v111, -6.9077554
    %v116 = vrcp.pop %v114
    %v117 = vmul.f32 1.0, %v116
    %v118 = vmul.f32 %v117, %v108
    %v119 = vsub.f32 %v106, %v118
    %v120 = vmul.f32 %v119, %v119
    %v121 = vmul.f32 %v120, %v114
    %v122 = vsub.f32 %v121, %v115
    %v123 = vld [vmem:[#allocation2] sm:$0xf]
    %v124 = vsel %vm110, %v122, 0.0
    %v125 = vadd.f32 %v123, %v124
    %126 = vst [vmem:[#allocation2] sm:$0xf] %v125
    %v127 = vld [vmem:[#allocation3] sm:$0x3]
    %v128 = vsel %vm110, 1.0, 0.0
    %v131 = vunpack.c.l.s4 1983009808
    %v132 = vunpack.c.0.s8 %v131
    %v133 = vlaneseq
    %v134 = vshrl.u32 %v133, 7
    %v135 = vsub.s32 %v132, %v134
    %v136 = vrot.slane %v128, %v135
    %v137 = vcombine.high %v136, %v136
    %vm140 = vcmask 1041408
    %v141 = vsel %vm140, %v136, 0.0
    %v142 = vsel %vm140, %v137, 0.0
    %v143 = vadd.f32 %v141, %v142
    %144 = vadd.xlane.f32.xlu0 %v143
    %v145 = vpop.xlane.xlu0 %144
    %v146 = vadd.f32 %v127, %v145
    %vm147 = vcmask 1024
    %148 = vst.msk [vmem:[#allocation3] sm:$0x3] %vm147, %v146
    // Predicated region
    $region30: #{tpu_custom_call.1} parent=1 // pred_check
      _
    $region31: #{tpu_custom_call.1} parent=1 // pred_check_branch
      %150 = sbr.rel (%p99) target = $region33
    $region32: #{tpu_custom_call.1} parent=1 // pred_region
      %v151 = vld [vmem:[#allocation2] sm:$0xf]
      %v154 = vunpack.c.l.s4 1983009808
      %v155 = vunpack.c.0.s8 %v154
      %v156 = vlaneseq
      %v157 = vshrl.u32 %v156, 7
      %v158 = vsub.s32 %v155, %v157
      %v159 = vrot.slane %v151, %v158
      %v160 = vcombine.high %v159, %v159
      %v163 = vsel %vm140, %v159, 0.0
      %v164 = vsel %vm140, %v160, 0.0
      %v165 = vadd.f32 %v163, %v164
      %166 = vadd.xlane.f32.xlu0 %v165
      %v167 = vpop.xlane.xlu0 %166
      %v168 = vrot.slane %v167, 4
      %v169 = vadd.f32 %v167, %v168
      %v170 = vrot.slane %v169, 2
      %v171 = vadd.f32 %v169, %v170
      %v172 = vrot.slane %v171, 1
      %v173 = vadd.f32 %v171, %v172
      %s174 = vtos %v173
      %s175 = scalar_lea.smem [#allocation9], 0
      %176 = sst [smem:[%s175]] %s174
      %v177 = vld [vmem:[#allocation3] sm:$0x3]
      %v178 = vsel %vm147, %v177, 0.0
      %179 = vadd.xlane.f32.xlu0 %v178
      %v180 = vpop.xlane.xlu0 %179
      %v181 = vrot.slane %v180, 4
      %v182 = vadd.f32 %v180, %v181
      %v183 = vrot.slane %v182, 2
      %v184 = vadd.f32 %v182, %v183
      %v185 = vrot.slane %v184, 1
      %v186 = vadd.f32 %v184, %v185
      %s187 = vtos %v186
      %s188 = scalar_lea.smem [#allocation9], 1
      %189 = sst [smem:[%s188]] %s187
    $region33: #{tpu_custom_call.1} parent=1 // pred_fallthru
      _
    // Predicated region
    $region34: #{tpu_custom_call.1} parent=1 // pred_check
      _
    $region35: #{tpu_custom_call.1} parent=1 // pred_check_branch
      %191 = sbr.rel (0) target = $region37
    $region36: #{tpu_custom_call.1} parent=1 // pred_region
      %s193 = ssub.s32 16, 16
      %194 = vsyncadd [#allocation6], %s193
      %197 = dma.smem_to_hbm [#allocation9], 16, %s4, [#allocation6]
    $region37: #{tpu_custom_call.1} parent=1 // pred_fallthru
      _
    // Predicated region
    $region38: #{tpu_custom_call.1} parent=1 // pred_check
      _
    $region39: #{tpu_custom_call.1} parent=1 // pred_check_branch
      %199 = sbr.rel (0) target = $region41
    $region40: #{tpu_custom_call.1} parent=1 // pred_region
      %200 = dma.done [#allocation6], 16
    $region41: #{tpu_custom_call.1} parent=1 // pred_fallthru
      _
    %201 = sfence
    %202 = vsyncpa [#allocation5], 1
    %203 = vsyncpa [#allocation8], 1
    %204 = vsyncpa [#allocation6], 1

</llo_original>
